<compile_context>
chip_gen: v7x
topology: tpu7x:2x2x1
jax: 0.10.0
libtpu: 0.0.40
codegen_flags: <defaults>
</compile_context>

<pallas_src>
import jax
import jax.numpy as jnp
from jax.experimental import pallas as pl
from jax.experimental.pallas import tpu as pltpu


# ----------------------------- kernel body -----------------------------------


def _scale_mul_kernel(scale_ref, x_ref, o_ref):
    # scale_ref: (TILE_N, 1), x_ref/o_ref: (TILE_N, TILE_F)
    o_ref[...] = (x_ref[...] * scale_ref[...]).astype(o_ref.dtype)


# --------------------------- tiling heuristics --------------------------------


def _chip_generation():
    """Best-effort TPU generation (7 / 6 / 5). Conservative fallback: 5."""
    try:
        kind = jax.devices()[0].device_kind.lower()
    except Exception:
        return 5
    for g in (7, 6, 5):
        if f"v{g}" in kind:
            return g
    return 5


def _choose_fold(n, f_total, itemsize):
    """Return g so x is viewed as (n*g, f_total//g) with healthy sublane use."""
    min_rows = max(8, 32 // max(1, itemsize))  # f32: 8, bf16: 16, int8/fp8: 32
    if n >= min_rows or f_total < 256:
        return 1
    target = -(-min_rows // n)  # ceil(min_rows / n)
    limit = min(f_total, 4096)
    best = None
    for g in range(target, limit + 1):
        if f_total % g != 0:
            continue
        if (f_total // g) % 128 != 0:
            continue  # keep the lane dim a multiple of 128
        if (n * g) % min_rows == 0:
            return g  # ideal: fully-packed sublanes
        if best is None:
            best = g
    if best is not None:
        return best
    # Fallback: any divisor giving >= target rows and a reasonably wide lane dim.
    for g in range(target, limit + 1):
        if f_total % g == 0 and (f_total // g) >= 128:
            return g
    return 1


def _tile_sizes(rows, f, itemsize, target_bytes, want_split):
    # Row (sublane) tile: full extent if it fits, else a multiple of 8.
    row_cap = 512
    tile_n = rows if rows <= row_cap else row_cap

    # Feature (lane) tile, budgeted so tile_n * tile_f * itemsize ~= target_bytes.
    budget_f = max(128, (target_bytes // max(1, tile_n * itemsize)) // 128 * 128)
    if f <= budget_f:
        tile_f = f
    else:
        tile_f = budget_f
        # Prefer a lane-dense tile that divides F exactly (no masked edge stores).
        for cand in range(budget_f, 127, -128):
            if f % cand == 0:
                tile_f = cand
                break

    # Guarantee >= 2 blocks of real work for multi-TensorCore chips (v7x).
    if want_split and rows * f * itemsize >= (1 << 20):
        if pl.cdiv(rows, tile_n) * pl.cdiv(f, tile_f) < 2:
            if tile_f >= 256 and tile_f % 256 == 0:
                tile_f //= 2
            elif tile_n >= 16 and tile_n % 16 == 0:
                tile_n //= 2

    return tile_n, tile_f


# ------------------------------ pallas_call -----------------------------------


def _apply_scale(x2, scale_col):
    """x2: (ROWS, F), scale_col: (ROWS, 1) -> (ROWS, F)."""
    rows, f = x2.shape
    itemsize = jnp.dtype(x2.dtype).itemsize
    gen = _chip_generation()

    if gen >= 7:
        target_bytes = 8 << 20          # ~8 MiB x-tile; amortize 0.35us step tax
        vmem_limit = 48 << 20           # > 32 MiB default scoped limit, < 64 MiB phys
    elif gen == 6:
        target_bytes = 4 << 20          # fits 32 MiB default scoped limit
        vmem_limit = None
    else:                               # v5e / unknown: stay under 16 MiB default
        target_bytes = 2 << 20
        vmem_limit = None

    tile_n, tile_f = _tile_sizes(rows, f, itemsize, target_bytes,
                                 want_split=(gen >= 7))
    grid = (pl.cdiv(rows, tile_n), pl.cdiv(f, tile_f))

    cost = pl.CostEstimate(
        flops=rows * f,
        transcendentals=0,
        bytes_accessed=2 * rows * f * itemsize
        + rows * jnp.dtype(scale_col.dtype).itemsize,
    )

    return pl.pallas_call(
        _scale_mul_kernel,
        out_shape=jax.ShapeDtypeStruct((rows, f), x2.dtype),
        grid_spec=pltpu.PrefetchScalarGridSpec(
            num_scalar_prefetch=0,
            grid=grid,
            in_specs=[
                pl.BlockSpec((tile_n, 1), lambda i, j: (i, 0)),
                pl.BlockSpec((tile_n, tile_f), lambda i, j: (i, j)),
            ],
            out_specs=pl.BlockSpec((tile_n, tile_f), lambda i, j: (i, j)),
        ),
        compiler_params=pltpu.CompilerParams(
            dimension_semantics=("parallel", "parallel"),
            vmem_limit_bytes=vmem_limit,
        ),
        cost_estimate=cost,
    )(scale_col, x2)


# ------------------------------- public API ------------------------------------


def stochastic_depth(x, p, mode, training=True, *, key=None, seed=0):
    """JAX/Pallas equivalent of torchvision's stochastic_depth (forward)."""
    if p < 0.0 or p > 1.0:
        raise ValueError(f"drop probability has to be between 0 and 1, but got {p}")
    if mode not in ("batch", "row"):
        raise ValueError(f"mode has to be either 'batch' or 'row', but got {mode}")
    if not training or p == 0.0:
        return x
    if p == 1.0:
        # survival_rate == 0: noise is all zeros and is NOT rescaled (matches torch).
        return jnp.zeros_like(x)

    survival_rate = 1.0 - p
    n = x.shape[0]
    f_total = 1
    for d in x.shape[1:]:
        f_total *= d
    if n == 0 or f_total == 0:
        return x
    itemsize = jnp.dtype(x.dtype).itemsize

    if key is None:
        # TODO(synk): in real training loops pass an explicit PRNG key (folding in
        # step/layer); a fixed default seed reuses the same drop mask every call.
        key = jax.random.PRNGKey(seed)

    if mode == "row":
        keep = jax.random.bernoulli(key, survival_rate, (n,))
    else:  # "batch": one draw shared by the whole batch
        keep = jnp.broadcast_to(jax.random.bernoulli(key, survival_rate, (1,)), (n,))

    # Fold trailing dims into the row axis so small batches fill the sublanes.
    g = _choose_fold(n, f_total, itemsize)
    rows = n * g
    f = f_total // g
    x2 = x.reshape(rows, f)  # metadata-only for contiguous inputs
    if g > 1:
        keep = jnp.repeat(keep, g)

    # Fold keep-mask and 1/survival_rate into a per-row scale.  Keep the scale in
    # f32 for sub-16-bit dtypes (fp8/int8) to avoid quantizing 1/(1-p).
    scale_dtype = x.dtype if itemsize >= 2 else jnp.float32
    scale_col = keep.astype(jnp.float32) / jnp.float32(survival_rate)
    scale_col = scale_col.astype(scale_dtype).reshape(rows, 1)

    out = _apply_scale(x2, scale_col)
    return out.reshape(x.shape)


class StochasticDepth:
    """See stochastic_depth(). Mirrors the PyTorch nn.Module forward."""

    def __init__(self, p: float, mode: str) -> None:
        self.p = p
        self.mode = mode
        self.training = True

    def __call__(self, x, key=None, seed=0):
        return stochastic_depth(x, self.p, self.mode, self.training,
                                key=key, seed=seed)

    def __repr__(self) -> str:
        return f"{self.__class__.__name__}(p={self.p}, mode={self.mode})"


# --------------------------------- tests ----------------------------------------


if __name__ == "__main__":
    key0 = jax.random.PRNGKey(0)
    x = jax.random.normal(key0, (2, 4, 16, 16), dtype=jnp.float32)  # NCHW, small N

    # --- mode="row" (small batch -> exercises the channel-fold path) ---
    mod_row = StochasticDepth(p=0.2, mode="row")
    y_row = jax.block_until_ready(mod_row(x, seed=123))
    assert y_row.shape == x.shape and y_row.dtype == x.dtype
    surv = 1.0 - mod_row.p
    for i in range(x.shape[0]):
        row = y_row[i]
        dropped = bool(jnp.all(row == 0.0))
        kept = bool(jnp.allclose(row, x[i] / surv, atol=1e-5))
        assert dropped or kept, "row must be either dropped or rescaled-kept"

    # --- mode="batch" ---
    mod_batch = StochasticDepth(p=0.2, mode="batch")
    y_batch = jax.block_until_ready(mod_batch(x, seed=7))
    dropped = bool(jnp.all(y_batch == 0.0))
    kept = bool(jnp.allclose(y_batch, x / surv, atol=1e-5))
    assert dropped or kept, "batch output must be either all-dropped or rescaled"

    # --- moderate shape to exercise real tiling ---
    x_big = jax.random.normal(jax.random.PRNGKey(1), (4, 8, 32, 32), jnp.float32)
    y_big = jax.block_until_ready(
        StochasticDepth(p=0.3, mode="row")(x_big, seed=42))
    assert y_big.shape == x_big.shape
    for i in range(x_big.shape[0]):
        row = y_big[i]
        dropped = bool(jnp.all(row == 0.0))
        kept = bool(jnp.allclose(row, x_big[i] / 0.7, atol=1e-4))
        assert dropped or kept

    # --- bf16 path ---
    x_bf = x.astype(jnp.bfloat16)
    y_bf = jax.block_until_ready(StochasticDepth(p=0.2, mode="row")(x_bf, seed=5))
    assert y_bf.shape == x_bf.shape and y_bf.dtype == jnp.bfloat16
    for i in range(x_bf.shape[0]):
        row = y_bf[i].astype(jnp.float32)
        ref = x_bf[i].astype(jnp.float32) / 0.8
        dropped = bool(jnp.all(row == 0.0))
        kept = bool(jnp.allclose(row, ref, rtol=5e-2, atol=1e-2))
        assert dropped or kept

    # --- p == 1.0: all-zero, no rescale ---
    y_all_drop = jax.block_until_ready(StochasticDepth(p=1.0, mode="row")(x))
    assert bool(jnp.all(y_all_drop == 0.0))

    # --- eval mode: identity ---
    mod_row.training = False
    y_eval = jax.block_until_ready(mod_row(x))
    assert bool(jnp.array_equal(y_eval, x))

    print("KERNEL_OK")
</pallas_src>

<mosaic_0001>
module attributes {stable_mosaic.version = 11 : i64} {
  func.func @_scale_mul_kernel(%arg0: i32, %arg1: i32, %arg2: memref<8x1xf32, #tpu.memory_space<vmem>>, %arg3: memref<8x256xf32, #tpu.memory_space<vmem>>, %arg4: memref<8x256xf32, #tpu.memory_space<vmem>>) attributes {dimension_semantics = [#tpu.dimension_semantics<parallel>, #tpu.dimension_semantics<parallel>], iteration_bounds = array<i64: 1, 1>, scalar_prefetch = 0 : i64, scratch_operands = 0 : i64, tpu.core_type = #tpu.core_type<tc>, window_params = [{transform_indices = @transform_0, window_bounds = array<i64: 8, 1>}, {transform_indices = @transform_1, window_bounds = array<i64: 8, 256>}, {transform_indices = @transform_2, window_bounds = array<i64: 8, 256>}]} {
    %c0 = arith.constant 0 : index
    %c0_0 = arith.constant 0 : index
    %0 = vector.load %arg3[%c0, %c0_0] : memref<8x256xf32, #tpu.memory_space<vmem>>, vector<8x256xf32>
    %c0_1 = arith.constant 0 : index
    %c0_2 = arith.constant 0 : index
    %1 = vector.load %arg2[%c0_1, %c0_2] : memref<8x1xf32, #tpu.memory_space<vmem>>, vector<8x1xf32>
    %2 = vector.broadcast %1 : vector<8x1xf32> to vector<8x256xf32>
    %3 = arith.mulf %0, %2 : vector<8x256xf32>
    %c0_3 = arith.constant 0 : index
    %c0_4 = arith.constant 0 : index
    %4 = vector.load %arg4[%c0_3, %c0_4] : memref<8x256xf32, #tpu.memory_space<vmem>>, vector<8x256xf32>
    tpu.vector_store %arg4[%c0_3, %c0_4], %3 {strides = array<i32>} : memref<8x256xf32, #tpu.memory_space<vmem>>, vector<8x256xf32>,
    return
  }
  func.func @transform_0(%arg0: i32, %arg1: i32) -> (i32, i32) {
    %c0_i32 = arith.constant 0 : i32
    %c0_i32_0 = arith.constant 0 : i32
    return %arg0, %c0_i32 : i32, i32
  }
  func.func @transform_1(%arg0: i32, %arg1: i32) -> (i32, i32) {
    %c0_i32 = arith.constant 0 : i32
    return %arg0, %arg1 : i32, i32
  }
  func.func @transform_2(%arg0: i32, %arg1: i32) -> (i32, i32) {
    %c0_i32 = arith.constant 0 : i32
    return %arg0, %arg1 : i32, i32
  }
}

</mosaic_0001>

<llo_original>
// kernel: tpu_custom_call.1
$region0: #{tpu_custom_call.1}
  #allocation0 [shape = 'u32[]', space=smem, size = 0x4, offset = 0x4, fixed_abs, tag = 'smem constant byte address 0x4 - core index']
  #allocation1 [shape = 'u32[144,128]{1,0:T(1,128)}', space=vmem, size = 0x12000, scoped, tag = 'internal scratch']
  %s0 = inlined_call_operand.vmem [shape: f32[8,1], index: 0, kind: input, shape index: {}]
  %s1 = inlined_call_operand.hbm [shape: f32[8,256], index: 1, kind: input, shape index: {}]
  %s2 = inlined_call_operand.hbm [shape: f32[8,256], index: 2, kind: output, shape index: {}]
  %s3 = sld [smem:[#allocation0]]
  $region22: #{tpu_custom_call.1} parent=0
    _
  %s5 = ssub.s32 1, %s3
  %s6 = scalar_select 0, %s5, %s3
  $region1: #{tpu_custom_call.1} parent=0
    #allocation2 [shape = 'u8[8192]{0}', space=vmem, size = 0x2000, scoped, tag = 'input window, operand 1, single buffered']
    #allocation3 [shape = 's32[1]{0}', space=sflag, size = 0x4, scoped, tag = 'scoped memory for tpu_custom_call.1']
    #allocation4 [shape = 's32[1]{0}', space=sflag, size = 0x4, scoped, tag = 'scoped memory for tpu_custom_call.1']
    #allocation5 [shape = 'u8[8192]{0}', space=vmem, size = 0x2000, scoped, tag = 'output window, operand 0, single buffered']
    %7 = vsyncpa [#allocation3], 0
    %8 = vsyncpa [#allocation4], 0
    // Predicated region
    $region2: #{tpu_custom_call.1} parent=1 // pred_check
      _
    $region3: #{tpu_custom_call.1} parent=1 // pred_check_branch
      %10 = sbr.rel (0) target = $region5
    $region4: #{tpu_custom_call.1} parent=1 // pred_region
      _
    $region5: #{tpu_custom_call.1} parent=1 // pred_fallthru
      _
    // Predicated region
    $region6: #{tpu_custom_call.1} parent=1 // pred_check
      _
    $region7: #{tpu_custom_call.1} parent=1 // pred_check_branch
      %12 = sbr.rel (0) target = $region9
    $region8: #{tpu_custom_call.1} parent=1 // pred_region
      %s14 = ssub.s32 256, 256
      %15 = vsyncadd [#allocation3], %s14
      %s17 = sshll.u32 [#allocation2], 4
      %s18 = int_to_ptr.vmem [resolvable:$true] %s17
      %20 = dma.hbm_to_vmem [thread:$0]  %s1, 256, %s18, [#allocation3]
    $region9: #{tpu_custom_call.1} parent=1 // pred_fallthru
      _
    // Predicated region
    $region10: #{tpu_custom_call.1} parent=1 // pred_check
      _
    $region11: #{tpu_custom_call.1} parent=1 // pred_check_branch
      %22 = sbr.rel (0) target = $region13
    $region12: #{tpu_custom_call.1} parent=1 // pred_region
      %23 = dma.done [#allocation3], 256
    $region13: #{tpu_custom_call.1} parent=1 // pred_fallthru
      _
    %v24 = vld [vmem:[#allocation2] sm:$0xff]
    %v25 = vld [vmem:[#allocation2 + $0x8] sm:$0xff]
    %v26 = vld [vmem:[%s0] sm:$0xff]
    %28 = vset.pattern.permute.xlu0 0
    %29 = vperm.xlu0 %28, %v26
    %v30 = vpop.permute.xlu0 %29
    %v32 = vmul.f32 %v24, %v30
    %v33 = vmul.f32 %v25, %v30
    %34 = vst [vmem:[#allocation5] sm:$0xff] %v32
    %35 = vst [vmem:[#allocation5 + $0x8] sm:$0xff] %v33
    // Predicated region
    $region14: #{tpu_custom_call.1} parent=1 // pred_check
      _
    $region15: #{tpu_custom_call.1} parent=1 // pred_check_branch
      %37 = sbr.rel (0) target = $region17
    $region16: #{tpu_custom_call.1} parent=1 // pred_region
      %s39 = ssub.s32 256, 256
      %40 = vsyncadd [#allocation4], %s39
      %s42 = sshll.u32 [#allocation5], 4
      %s43 = int_to_ptr.vmem [resolvable:$true] %s42
      %45 = dma.vmem_to_hbm [thread:$0]  %s43, 256, %s2, [#allocation4]
    $region17: #{tpu_custom_call.1} parent=1 // pred_fallthru
      _
    // Predicated region
    $region18: #{tpu_custom_call.1} parent=1 // pred_check
      _
    $region19: #{tpu_custom_call.1} parent=1 // pred_check_branch
      %47 = sbr.rel (0) target = $region21
    $region20: #{tpu_custom_call.1} parent=1 // pred_region
      %48 = dma.done [#allocation4], 256
    $region21: #{tpu_custom_call.1} parent=1 // pred_fallthru
      _
    %49 = vsyncpa [#allocation3], 1
    %50 = vsyncpa [#allocation4], 1

</llo_original>
